<compile_context>
chip_gen: v7x
topology: tpu7x:2x2x1
jax: 0.10.0
libtpu: 0.0.40
codegen_flags: <defaults>
</compile_context>

<pallas_src>
import functools

import jax
import jax.numpy as jnp
from jax import lax
from jax.experimental import pallas as pl
from jax.experimental.pallas import tpu as pltpu


def _round_up(x: int, m: int) -> int:
    return ((x + m - 1) // m) * m


def _cdiv(a: int, b: int) -> int:
    return (a + b - 1) // b


def summation_kernel(pattern_ref, mask_ref, inv_ref, out_ref, *,
                     f_total: int, tf: int, needs_f_mask: bool):
    k = pl.program_id(2)

    @pl.when(k == 0)
    def _():
        out_ref[...] = jnp.zeros_like(out_ref)

    pat = pattern_ref[...]                      # f32 tile straight from HBM
    if needs_f_mask:                            # static: only emitted when F % tf != 0
        col = k * tf + lax.broadcasted_iota(jnp.int32, pat.shape, 1)
        pat = jnp.where(col < f_total, pat, 0.0)

    # (TB, TF) . (TC, TF) contracted over the shared last (F) axis: the MXU eats
    # the mask tile in its native RHS-transposed form, no in-kernel transpose.
    out_ref[...] += lax.dot_general(
        pat.astype(jnp.bfloat16), mask_ref[...],
        dimension_numbers=(((1,), (1,)), ((), ())),
        preferred_element_type=jnp.float32)

    @pl.when(k == pl.num_programs(2) - 1)
    def _():
        out_ref[...] *= inv_ref[...]            # broadcast (1, TC) over batch rows


def summation_layer(pattern: jax.Array, class_index: jax.Array,
                    *, tb: int = 512, tc: int = 512, tf: int = 2048) -> jax.Array:
    """pattern: (B, F) float; class_index: (C, F) 0/1 mask -> (B, C) float32."""
    B, F = pattern.shape
    C, F2 = class_index.shape
    assert F == F2, "pattern and class_index feature dims must match"
    assert tb % 8 == 0 and tc % 128 == 0 and tf % 128 == 0

    pattern = pattern.astype(jnp.float32)       # no padded copy; bf16 cast in-kernel

    # Clamp tiles to the problem (small shapes must not pay for hard 256/512 pads).
    C_pad = _round_up(C, 128)                   # lane-dense output columns
    tb = min(tb, B)                             # == B (full dim) or a multiple of 8
    tc = min(tc, C_pad)                         # always a multiple of 128
    tf = min(tf, F)                             # == F (full dim) or a multiple of 128

    # v7x has 2 TensorCores: expose >= 2 blocks along a parallel axis when possible.
    if _cdiv(B, tb) == 1 and _cdiv(C_pad, tc) == 1 and B >= 256:
        tb = _round_up(_cdiv(B, 2), 8)

    grid = (_cdiv(B, tb), _cdiv(C_pad, tc), _cdiv(F, tf))
    needs_f_mask = (F % tf) != 0                # ragged reduction edge -> mask in kernel
    F_m = grid[2] * tf                          # mask padded along F: edge tiles are zeros

    # The mask is tiny; pad it (zeros) and pre-cast to bf16 (0/1 is exact).
    mask_p = jnp.zeros((C_pad, F_m), jnp.bfloat16).at[:C, :F].set(
        class_index.astype(jnp.bfloat16))

    # Per-class 1/count, applied once in the epilogue (no per-step count matmul,
    # no VPU divide).  Zero-count classes give inf -> 0*inf = NaN, like PyTorch 0/0.
    counts = class_index.astype(jnp.float32).sum(axis=1)                  # (C,)
    inv_counts = jnp.ones((1, C_pad), jnp.float32).at[0, :C].set(1.0 / counts)

    kernel = functools.partial(summation_kernel, f_total=F, tf=tf,
                               needs_f_mask=needs_f_mask)

    n_i, n_j, n_k = grid
    flops = 2 * (n_i * tb) * (n_j * tc) * (n_k * tf)
    bytes_accessed = (B * F * 4 * n_j           # pattern re-read once per j block
                      + mask_p.size * 2 * n_i   # mask re-read once per i block
                      + inv_counts.size * 4 * n_i
                      + B * C_pad * 4)          # output written once

    out = pl.pallas_call(
        kernel,
        out_shape=jax.ShapeDtypeStruct((B, C_pad), jnp.float32),
        grid_spec=pltpu.PrefetchScalarGridSpec(
            num_scalar_prefetch=0,
            grid=grid,
            in_specs=[
                pl.BlockSpec((tb, tf), lambda i, j, k: (i, k)),   # pattern tile (f32)
                pl.BlockSpec((tc, tf), lambda i, j, k: (j, k)),   # mask tile (bf16)
                pl.BlockSpec((1, tc), lambda i, j, k: (0, j)),    # 1/count tile
                # If a profile still shows exposed DMA, add
                # pipeline_mode=pl.Buffered(3) to the pattern/mask specs and sweep.
            ],
            out_specs=pl.BlockSpec((tb, tc), lambda i, j, k: (i, j)),
        ),
        compiler_params=pltpu.CompilerParams(
            dimension_semantics=("parallel", "parallel", "arbitrary"),
            # ~15 MiB double-buffered at default tiles; 48 MiB leaves headroom for
            # deeper buffering while staying under v7x's 64 MiB physical VMEM.
            vmem_limit_bytes=48 * 1024 * 1024,
        ),
        cost_estimate=pl.CostEstimate(
            flops=flops, transcendentals=0, bytes_accessed=bytes_accessed),
    )(pattern, mask_p, inv_counts)

    return out[:, :C]


if __name__ == "__main__":
    # Small, deterministic example shapes (batch=8, features=16, classes=4).
    B, F, C = 8, 16, 4

    key = jax.random.PRNGKey(0)
    pattern = jax.random.normal(key, (B, F), dtype=jnp.float32)

    # Deterministic binary class-membership mask: feature f belongs to class
    # (f % C); class 0 additionally owns feature 1 so counts differ per class.
    feat = jnp.arange(F)
    base = (feat[None, :] % C) == jnp.arange(C)[:, None]
    extra = (jnp.arange(C)[:, None] == 0) & (feat[None, :] == 1)
    class_index = (base | extra).astype(jnp.int32)            # (C, F), 0/1

    out = summation_layer(pattern, class_index)
    out = jax.block_until_ready(out)

    # Pure-JAX references.  The kernel feeds the MXU a bf16-cast pattern with f32
    # accumulation: compare tightly against the bf16-rounded-input reference and
    # loosely against full-f32 math.
    mask = class_index.astype(jnp.float32)
    counts = mask.sum(axis=1)
    ref_bf16_in = (pattern.astype(jnp.bfloat16).astype(jnp.float32) @ mask.T) \
        / counts[None, :]
    ref_f32 = (pattern @ mask.T) / counts[None, :]

    assert out.shape == (B, C) and out.dtype == jnp.float32
    assert jnp.allclose(out, ref_bf16_in, atol=1e-4, rtol=1e-4), \
        "mismatch vs bf16-input reference"
    assert jnp.allclose(out, ref_f32, atol=3e-2, rtol=3e-2), \
        "mismatch vs f32 reference beyond bf16 rounding"

    print("KERNEL_OK")
</pallas_src>

<mosaic_0001>
module attributes {stable_mosaic.version = 11 : i64} {
  func.func @summation_kernel(%arg0: i32, %arg1: i32, %arg2: i32, %arg3: memref<8x16xf32, #tpu.memory_space<vmem>>, %arg4: memref<128x16xbf16, #tpu.memory_space<vmem>>, %arg5: memref<1x128xf32, #tpu.memory_space<vmem>>, %arg6: memref<8x128xf32, #tpu.memory_space<vmem>>) attributes {dimension_semantics = [#tpu.dimension_semantics<parallel>, #tpu.dimension_semantics<parallel>, #tpu.dimension_semantics<arbitrary>], iteration_bounds = array<i64: 1, 1, 1>, scalar_prefetch = 0 : i64, scratch_operands = 0 : i64, tpu.core_type = #tpu.core_type<tc>, window_params = [{transform_indices = @transform_0, window_bounds = array<i64: 8, 16>}, {transform_indices = @transform_1, window_bounds = array<i64: 128, 16>}, {transform_indices = @transform_2, window_bounds = array<i64: 1, 128>}, {transform_indices = @transform_3, window_bounds = array<i64: 8, 128>}]} {
    %c0_i32 = arith.constant 0 : i32
    %0 = arith.cmpi eq, %arg2, %c0_i32 : i32
    %1 = arith.extui %0 : i1 to i32
    %c0_i32_0 = arith.constant 0 : i32
    %2 = arith.cmpi ne, %1, %c0_i32_0 : i32
    scf.if %2 {
      %cst_10 = arith.constant 0.000000e+00 : f32
      %13 = vector.broadcast %cst_10 : f32 to vector<8x128xf32>
      %c0_11 = arith.constant 0 : index
      %c0_12 = arith.constant 0 : index
      %14 = vector.load %arg6[%c0_11, %c0_12] : memref<8x128xf32, #tpu.memory_space<vmem>>, vector<8x128xf32>
      tpu.vector_store %arg6[%c0_11, %c0_12], %13 {strides = array<i32>} : memref<8x128xf32, #tpu.memory_space<vmem>>, vector<8x128xf32>,
    } else {
    }
    %c0 = arith.constant 0 : index
    %c0_1 = arith.constant 0 : index
    %3 = vector.load %arg3[%c0, %c0_1] : memref<8x16xf32, #tpu.memory_space<vmem>>, vector<8x16xf32>
    %c0_2 = arith.constant 0 : index
    %c0_3 = arith.constant 0 : index
    %4 = vector.load %arg6[%c0_2, %c0_3] : memref<8x128xf32, #tpu.memory_space<vmem>>, vector<8x128xf32>
    %5 = arith.truncf %3 : vector<8x16xf32> to vector<8x16xbf16>
    %c0_4 = arith.constant 0 : index
    %c0_5 = arith.constant 0 : index
    %6 = vector.load %arg4[%c0_4, %c0_5] : memref<128x16xbf16, #tpu.memory_space<vmem>>, vector<128x16xbf16>
    %cst = arith.constant dense<0.000000e+00> : vector<8x128xf32>
    %7 = tpu.matmul %5, %6, %cst {dimension_numbers = #tpu.dot_dimension_numbers<[1], [1], [0], [0], [0, 0, 1, 0], [], []>} : vector<8x16xbf16>, vector<128x16xbf16>, vector<8x128xf32> -> vector<8x128xf32>
    %8 = arith.addf %4, %7 : vector<8x128xf32>
    %c0_6 = arith.constant 0 : index
    %c0_7 = arith.constant 0 : index
    %9 = vector.load %arg6[%c0_6, %c0_7] : memref<8x128xf32, #tpu.memory_space<vmem>>, vector<8x128xf32>
    tpu.vector_store %arg6[%c0_6, %c0_7], %8 {strides = array<i32>} : memref<8x128xf32, #tpu.memory_space<vmem>>, vector<8x128xf32>,
    %c0_i32_8 = arith.constant 0 : i32
    %10 = arith.cmpi eq, %arg2, %c0_i32_8 : i32
    %11 = arith.extui %10 : i1 to i32
    %c0_i32_9 = arith.constant 0 : i32
    %12 = arith.cmpi ne, %11, %c0_i32_9 : i32
    scf.if %12 {
      %c0_10 = arith.constant 0 : index
      %c0_11 = arith.constant 0 : index
      %13 = vector.load %arg6[%c0_10, %c0_11] : memref<8x128xf32, #tpu.memory_space<vmem>>, vector<8x128xf32>
      %c0_12 = arith.constant 0 : index
      %c0_13 = arith.constant 0 : index
      %14 = vector.load %arg5[%c0_12, %c0_13] : memref<1x128xf32, #tpu.memory_space<vmem>>, vector<1x128xf32>
      %15 = vector.broadcast %14 : vector<1x128xf32> to vector<8x128xf32>
      %16 = arith.mulf %13, %15 : vector<8x128xf32>
      %c0_14 = arith.constant 0 : index
      %c0_15 = arith.constant 0 : index
      %17 = vector.load %arg6[%c0_14, %c0_15] : memref<8x128xf32, #tpu.memory_space<vmem>>, vector<8x128xf32>
      tpu.vector_store %arg6[%c0_14, %c0_15], %16 {strides = array<i32>} : memref<8x128xf32, #tpu.memory_space<vmem>>, vector<8x128xf32>,
    } else {
    }
    return
  }
  func.func @transform_0(%arg0: i32, %arg1: i32, %arg2: i32) -> (i32, i32) {
    %c0_i32 = arith.constant 0 : i32
    return %arg0, %arg2 : i32, i32
  }
  func.func @transform_1(%arg0: i32, %arg1: i32, %arg2: i32) -> (i32, i32) {
    %c0_i32 = arith.constant 0 : i32
    return %arg1, %arg2 : i32, i32
  }
  func.func @transform_2(%arg0: i32, %arg1: i32, %arg2: i32) -> (i32, i32) {
    %c0_i32 = arith.constant 0 : i32
    %c0_i32_0 = arith.constant 0 : i32
    return %c0_i32, %arg1 : i32, i32
  }
  func.func @transform_3(%arg0: i32, %arg1: i32, %arg2: i32) -> (i32, i32) {
    %c0_i32 = arith.constant 0 : i32
    return %arg0, %arg1 : i32, i32
  }
}

</mosaic_0001>

<llo_original>
// kernel: tpu_custom_call.1
$region0: #{tpu_custom_call.1}
  #allocation0 [shape = 'u32[]', space=smem, size = 0x4, offset = 0x4, fixed_abs, tag = 'smem constant byte address 0x4 - core index']
  #allocation1 [shape = 'u32[144,128]{1,0:T(1,128)}', space=vmem, size = 0x12000, scoped, tag = 'internal scratch']
  %s0 = inlined_call_operand.vmem [shape: f32[8,16], index: 0, kind: input, shape index: {}]
  %s1 = inlined_call_operand.vmem [shape: bf16[128,16], index: 1, kind: input, shape index: {}]
  %s2 = inlined_call_operand.vmem [shape: f32[1,128], index: 2, kind: input, shape index: {}]
  %s3 = inlined_call_operand.hbm [shape: f32[8,128], index: 3, kind: output, shape index: {}]
  %s4 = sld [smem:[#allocation0]]
  $region30: #{tpu_custom_call.1} parent=0
    _
  %s6 = ssub.s32 1, %s4
  %s7 = scalar_select 0, %s6, %s4
  $region1: #{tpu_custom_call.1} parent=0
    #allocation2 [shape = 'u8[4096]{0}', space=vmem, size = 0x1000, scoped, tag = 'output window, operand 0, single buffered']
    #allocation3 [shape = 's32[1]{0}', space=sflag, size = 0x4, scoped, tag = 'scoped memory for tpu_custom_call.1']
    %8 = vsyncpa [#allocation3], 0
    // Predicated region
    $region2: #{tpu_custom_call.1} parent=1 // pred_check
      _
    $region3: #{tpu_custom_call.1} parent=1 // pred_check_branch
      %10 = sbr.rel (0) target = $region5
    $region4: #{tpu_custom_call.1} parent=1 // pred_region
      _
    $region5: #{tpu_custom_call.1} parent=1 // pred_fallthru
      _
    // Predicated region
    $region6: #{tpu_custom_call.1} parent=1 // pred_check
      _
    $region7: #{tpu_custom_call.1} parent=1 // pred_check_branch
      %12 = sbr.rel (0) target = $region9
    $region8: #{tpu_custom_call.1} parent=1 // pred_region
      _
    $region9: #{tpu_custom_call.1} parent=1 // pred_fallthru
      _
    // Predicated region
    $region10: #{tpu_custom_call.1} parent=1 // pred_check
      _
    $region11: #{tpu_custom_call.1} parent=1 // pred_check_branch
      %14 = sbr.rel (0) target = $region13
    $region12: #{tpu_custom_call.1} parent=1 // pred_region
      _
    $region13: #{tpu_custom_call.1} parent=1 // pred_fallthru
      _
    %p16 = scmp.eq.s32.totalorder 0, 0
    // Predicated region
    $region14: #{tpu_custom_call.1} parent=1 // pred_check
      %p17 = pneg %p16
    $region15: #{tpu_custom_call.1} parent=1 // pred_check_branch
      %19 = sbr.rel (%p17) target = $region17
    $region16: #{tpu_custom_call.1} parent=1 // pred_region
      %20 = vst [vmem:[#allocation2] sm:$0xff] 0.0
    $region17: #{tpu_custom_call.1} parent=1 // pred_fallthru
      _
    %v21 = vld [vmem:[%s0] sm:$0xff]
    %v22 = vld [vmem:[#allocation2] sm:$0xff]
    %v23 = vpack.c.bf16 %v21, %v21
    %v24 = vld [vmem:[%s1] sm:$0xf]
    %v25 = vld [vmem:[%s1 + $0x4] sm:$0xf]
    %v26 = vld [vmem:[%s1 + $0x8] sm:$0xf]
    %v27 = vld [vmem:[%s1 + $0xc] sm:$0xf]
    %v28 = vld [vmem:[%s1 + $0x10] sm:$0xf]
    %v29 = vld [vmem:[%s1 + $0x14] sm:$0xf]
    %v30 = vld [vmem:[%s1 + $0x18] sm:$0xf]
    %v31 = vld [vmem:[%s1 + $0x1c] sm:$0xf]
    %v32 = vld [vmem:[%s1 + $0x20] sm:$0xf]
    %v33 = vld [vmem:[%s1 + $0x24] sm:$0xf]
    %v34 = vld [vmem:[%s1 + $0x28] sm:$0xf]
    %v35 = vld [vmem:[%s1 + $0x2c] sm:$0xf]
    %v36 = vld [vmem:[%s1 + $0x30] sm:$0xf]
    %v37 = vld [vmem:[%s1 + $0x34] sm:$0xf]
    %v38 = vld [vmem:[%s1 + $0x38] sm:$0xf]
    %v39 = vld [vmem:[%s1 + $0x3c] sm:$0xf]
    %v56 = vunpack.c.l.b16 %v24
    %v57 = vunpack.c.l.b16 %v25
    %v58 = vunpack.c.l.b16 %v26
    %v59 = vunpack.c.l.b16 %v27
    %v60 = vunpack.c.l.b16 %v28
    %v61 = vunpack.c.l.b16 %v29
    %v62 = vunpack.c.l.b16 %v30
    %v63 = vunpack.c.l.b16 %v31
    %v64 = vunpack.c.l.b16 %v32
    %v65 = vunpack.c.l.b16 %v33
    %v66 = vunpack.c.l.b16 %v34
    %v67 = vunpack.c.l.b16 %v35
    %v68 = vunpack.c.l.b16 %v36
    %v69 = vunpack.c.l.b16 %v37
    %v70 = vunpack.c.l.b16 %v38
    %v71 = vunpack.c.l.b16 %v39
    %v72 = vpack.c.b16 %v57, %v56
    %v73 = vpack.c.b16 %v59, %v58
    %v74 = vpack.c.b16 %v61, %v60
    %v75 = vpack.c.b16 %v63, %v62
    %v76 = vpack.c.b16 %v65, %v64
    %v77 = vpack.c.b16 %v67, %v66
    %v78 = vpack.c.b16 %v69, %v68
    %v79 = vpack.c.b16 %v71, %v70
    %vm80 = vcmask 130048
    %v82 = vsel %vm80, %v23, 0
    %v85 = vsel %vm80, %v72, 0
    %v88 = vsel %vm80, %v73, 0
    %v91 = vsel %vm80, %v74, 0
    %v94 = vsel %vm80, %v75, 0
    %v97 = vsel %vm80, %v76, 0
    %v100 = vsel %vm80, %v77, 0
    %v103 = vsel %vm80, %v78, 0
    %v106 = vsel %vm80, %v79, 0
    %108 = vmatprep.subr.bf16.mxu0 0
    %109 = vmatpush1.bf16.xpose.msra.mxu0 %v85
    %110 = vmatprep.subr.bf16.mxu0 0
    %111 = vmatpush1.bf16.xpose.msra.mxu0 %v88
    %112 = vmatprep.subr.bf16.mxu0 0
    %113 = vmatpush1.bf16.xpose.msra.mxu0 %v91
    %114 = vmatprep.subr.bf16.mxu0 0
    %115 = vmatpush1.bf16.xpose.msra.mxu0 %v94
    %116 = vmatprep.subr.bf16.mxu0 0
    %117 = vmatpush1.bf16.xpose.msra.mxu0 %v97
    %118 = vmatprep.subr.bf16.mxu0 0
    %119 = vmatpush1.bf16.xpose.msra.mxu0 %v100
    %120 = vmatprep.subr.bf16.mxu0 0
    %121 = vmatpush1.bf16.xpose.msra.mxu0 %v103
    %122 = vmatprep.subr.bf16.mxu0 0
    %123 = vmatpush1.bf16.xpose.msra.mxu0 %v106
    %124 = vmatprep.subr.bf16.mxu0 0
    %125 = vmatpush1.bf16.xpose.msra.mxu0 0
    %126 = vmatprep.subr.bf16.mxu0 0
    %127 = vmatpush1.bf16.xpose.msra.mxu0 0
    %128 = vmatprep.subr.bf16.mxu0 0
    %129 = vmatpush1.bf16.xpose.msra.mxu0 0
    %130 = vmatprep.subr.bf16.mxu0 0
    %131 = vmatpush1.bf16.xpose.msra.mxu0 0
    %132 = vmatprep.subr.bf16.mxu0 0
    %133 = vmatpush1.bf16.xpose.msra.mxu0 0
    %134 = vmatprep.subr.bf16.mxu0 0
    %135 = vmatpush1.bf16.xpose.msra.mxu0 0
    %136 = vmatprep.subr.bf16.mxu0 0
    %137 = vmatpush1.bf16.xpose.msra.mxu0 0
    %138 = vmatprep.subr.bf16.mxu0 0
    %139 = vmatpush1.bf16.xpose.msra.mxu0 0
    %140 = vmatprep.mubr.bf16.mxu0 0
    %141 = vmatmul.mubr.bf16.gmra.mrb[0].mxu0 %v82
    %v142 = vpop.f32.mrb[0].mxu0
    %v143 = vadd.f32 0.0, %v142
    %v144 = vpop.f32.mrb[0].mxu0
    %v145 = vpop.f32.mrb[0].mxu0
    %v146 = vpop.f32.mrb[0].mxu0
    %147 = vdwg.mxu0
    %v148 = vadd.f32 %v22, %v143
    %149 = vst [vmem:[#allocation2] sm:$0xff] %v148
    // Predicated region
    $region18: #{tpu_custom_call.1} parent=1 // pred_check
      %p150 = pneg %p16
    $region19: #{tpu_custom_call.1} parent=1 // pred_check_branch
      %152 = sbr.rel (%p150) target = $region21
    $region20: #{tpu_custom_call.1} parent=1 // pred_region
      %v153 = vld [vmem:[#allocation2] sm:$0xff]
      %v154 = vld [vmem:[%s2] sm:$0x1]
      %v156 = vlaneseq
      %v157 = vshrl.u32 %v156, 7
      %v158 = vsub.s32 0, %v157
      %v159 = vrot.slane %v154, %v158
      %v161 = vmul.f32 %v153, %v159
      %162 = vst [vmem:[#allocation2] sm:$0xff] %v161
    $region21: #{tpu_custom_call.1} parent=1 // pred_fallthru
      _
    // Predicated region
    $region22: #{tpu_custom_call.1} parent=1 // pred_check
      _
    $region23: #{tpu_custom_call.1} parent=1 // pred_check_branch
      %164 = sbr.rel (0) target = $region25
    $region24: #{tpu_custom_call.1} parent=1 // pred_region
      %s166 = ssub.s32 128, 128
      %167 = vsyncadd [#allocation3], %s166
      %s169 = sshll.u32 [#allocation2], 4
      %s170 = int_to_ptr.vmem [resolvable:$true] %s169
      %172 = dma.vmem_to_hbm [thread:$0]  %s170, 128, %s3, [#allocation3]
    $region25: #{tpu_custom_call.1} parent=1 // pred_fallthru
      _
    // Predicated region
    $region26: #{tpu_custom_call.1} parent=1 // pred_check
      _
    $region27: #{tpu_custom_call.1} parent=1 // pred_check_branch
      %174 = sbr.rel (0) target = $region29
    $region28: #{tpu_custom_call.1} parent=1 // pred_region
      %175 = dma.done [#allocation3], 128
    $region29: #{tpu_custom_call.1} parent=1 // pred_fallthru
      _
    %176 = vsyncpa [#allocation3], 1

</llo_original>
